<compile_context>
chip_gen: v7x
topology: tpu7x:2x2x1
jax: 0.10.0
libtpu: 0.0.40
codegen_flags: <defaults>
</compile_context>

<pallas_src>
import math

import jax
import jax.numpy as jnp
from jax.experimental import pallas as pl
from jax.experimental.pallas import tpu as pltpu

LANE = 128
_VMEM_LIMIT_BYTES = 32 * 1024 * 1024   # scoped VMEM; legal on v5e/v6e/v7x
_TILE_BUDGET_BYTES = 24 * 1024 * 1024  # 2x(x tile) + 2x(out tile) budget
_MAX_TILE_ROWS = 2048                  # 512-2048 rows hits ~85%+ of HBM roofline


def _sublane(dtype) -> int:
    # Sublane packing: 8 rows for f32, 16 for bf16, 32 for int8/fp8.
    return max(8, 32 // jnp.dtype(dtype).itemsize)


def bias_add_kernel(x_ref, b_ref, o_ref):
    # x_ref: (tile_rows, tile_cols); b_ref: (1, tile_cols) broadcasts over rows.
    o_ref[...] = x_ref[...] + b_ref[...]


def bias_model_forward(x, bias, *, tile_rows=None, tile_cols=None):
    """Pallas TPU implementation of BiasModel.forward: x + bias."""
    orig_shape = x.shape
    c = orig_shape[-1]
    assert bias.shape == (c,), "bias must match the last dim of x"
    bias = bias.astype(x.dtype)
    x2d = x.reshape(-1, c)
    n = x2d.shape[0]

    # ---- Lane-dense folding: for narrow C, fold g consecutive rows into one
    # row of width g*C (a multiple of 128) and tile the bias g times. Row-major
    # reshape keeps semantics identical and makes every store full lane width.
    g = 1
    if c < LANE:
        g_cand = math.lcm(c, LANE) // c
        if n % g_cand == 0:
            g = g_cand
    if g > 1:
        xw = x2d.reshape(n // g, g * c)
        bw = jnp.tile(bias, g)
    else:
        xw = x2d
        bw = bias
    nw, cw = xw.shape
    bias2d = bw.reshape(1, cw)

    itemsize = jnp.dtype(x.dtype).itemsize
    sub = _sublane(x.dtype)

    # ---- Column tile (only for very wide, lane-aligned C).
    default_cols = cw if (cw <= 4096 or cw % LANE != 0) else 4096
    if tile_cols is None:
        tile_cols = default_cols
    if tile_cols != cw:
        tile_cols = max(LANE, (tile_cols // LANE) * LANE)
        tile_cols = min(tile_cols, cw)
        if cw < LANE:
            tile_cols = cw

    # ---- Row tile: largest sublane-aligned tile within the VMEM budget.
    max_rows_by_vmem = max(1, _TILE_BUDGET_BYTES // (4 * tile_cols * itemsize))
    user_rows = tile_rows is not None
    if tile_rows is None:
        tile_rows = _MAX_TILE_ROWS
    tile_rows = max(1, min(tile_rows, nw, max_rows_by_vmem))
    if tile_rows < nw:
        tile_rows = max(sub, (tile_rows // sub) * sub)
        tile_rows = min(tile_rows, nw)

    # Give both v7x TensorCores work once the tensor is big enough to amortize
    # the per-step overhead (~0.35 us/step): prefer >= 2 row-grid steps.
    if (not user_rows and tile_rows == nw and nw >= 2 * sub
            and nw * cw * itemsize >= (2 << 20)):
        tile_rows = max(sub, (((nw + 1) // 2) // sub) * sub)

    grid = (pl.cdiv(nw, tile_rows), pl.cdiv(cw, tile_cols))

    out = pl.pallas_call(
        bias_add_kernel,
        out_shape=jax.ShapeDtypeStruct((nw, cw), x.dtype),
        grid_spec=pltpu.PrefetchScalarGridSpec(
            num_scalar_prefetch=0,
            grid=grid,
            in_specs=[
                pl.BlockSpec((tile_rows, tile_cols), lambda i, j: (i, j)),
                pl.BlockSpec((1, tile_cols), lambda i, j: (0, j)),
            ],
            out_specs=pl.BlockSpec((tile_rows, tile_cols), lambda i, j: (i, j)),
        ),
        compiler_params=pltpu.CompilerParams(
            dimension_semantics=("parallel", "parallel"),
            vmem_limit_bytes=_VMEM_LIMIT_BYTES,
        ),
    )(xw, bias2d)

    return out.reshape(orig_shape)


if __name__ == "__main__":
    key = jax.random.PRNGKey(0)
    kx, kb, kx2, kb2 = jax.random.split(key, 4)

    # Primary shape implied by the module: (batch, classes) with small classes.
    # This exercises the lane-dense folding path ((8, 32) -> (2, 128)).
    classes = 32
    batch = 8
    x = jax.random.normal(kx, (batch, classes), dtype=jnp.float32)
    # nn.Parameter(torch.zeros(classes)) starts at zero; use a small non-zero
    # bias to exercise the broadcast path.
    bias = jax.random.normal(kb, (classes,), dtype=jnp.float32) * 0.1

    out = jax.block_until_ready(bias_model_forward(x, bias))
    ref = x + bias
    assert out.shape == (batch, classes)
    assert jnp.allclose(out, ref, atol=1e-6), "mismatch vs reference (folded path)"

    # Secondary small check: generic path with a multi-step row grid.
    x2 = jax.random.normal(kx2, (64, 256), dtype=jnp.float32)
    b2 = jax.random.normal(kb2, (256,), dtype=jnp.float32) * 0.1
    out2 = jax.block_until_ready(bias_model_forward(x2, b2, tile_rows=16))
    assert jnp.allclose(out2, x2 + b2, atol=1e-6), "mismatch vs reference (tiled path)"

    print("KERNEL_OK")
</pallas_src>

<mosaic_0001>
module attributes {stable_mosaic.version = 11 : i64} {
  func.func @bias_add_kernel(%arg0: i32, %arg1: i32, %arg2: memref<2x128xf32, #tpu.memory_space<vmem>>, %arg3: memref<1x128xf32, #tpu.memory_space<vmem>>, %arg4: memref<2x128xf32, #tpu.memory_space<vmem>>) attributes {dimension_semantics = [#tpu.dimension_semantics<parallel>, #tpu.dimension_semantics<parallel>], iteration_bounds = array<i64: 1, 1>, scalar_prefetch = 0 : i64, scratch_operands = 0 : i64, tpu.core_type = #tpu.core_type<tc>, window_params = [{transform_indices = @transform_0, window_bounds = array<i64: 2, 128>}, {transform_indices = @transform_1, window_bounds = array<i64: 1, 128>}, {transform_indices = @transform_2, window_bounds = array<i64: 2, 128>}]} {
    %c0 = arith.constant 0 : index
    %c0_0 = arith.constant 0 : index
    %0 = vector.load %arg2[%c0, %c0_0] : memref<2x128xf32, #tpu.memory_space<vmem>>, vector<2x128xf32>
    %c0_1 = arith.constant 0 : index
    %c0_2 = arith.constant 0 : index
    %1 = vector.load %arg3[%c0_1, %c0_2] : memref<1x128xf32, #tpu.memory_space<vmem>>, vector<1x128xf32>
    %2 = vector.broadcast %1 : vector<1x128xf32> to vector<2x128xf32>
    %3 = arith.addf %0, %2 : vector<2x128xf32>
    %c0_3 = arith.constant 0 : index
    %c0_4 = arith.constant 0 : index
    %4 = vector.load %arg4[%c0_3, %c0_4] : memref<2x128xf32, #tpu.memory_space<vmem>>, vector<2x128xf32>
    tpu.vector_store %arg4[%c0_3, %c0_4], %3 {strides = array<i32>} : memref<2x128xf32, #tpu.memory_space<vmem>>, vector<2x128xf32>,
    return
  }
  func.func @transform_0(%arg0: i32, %arg1: i32) -> (i32, i32) {
    %c0_i32 = arith.constant 0 : i32
    return %arg0, %arg1 : i32, i32
  }
  func.func @transform_1(%arg0: i32, %arg1: i32) -> (i32, i32) {
    %c0_i32 = arith.constant 0 : i32
    %c0_i32_0 = arith.constant 0 : i32
    return %c0_i32, %arg1 : i32, i32
  }
  func.func @transform_2(%arg0: i32, %arg1: i32) -> (i32, i32) {
    %c0_i32 = arith.constant 0 : i32
    return %arg0, %arg1 : i32, i32
  }
}

</mosaic_0001>

<llo_original>
// kernel: tpu_custom_call.1
$region0: #{tpu_custom_call.1}
  #allocation0 [shape = 'u32[]', space=smem, size = 0x4, offset = 0x4, fixed_abs, tag = 'smem constant byte address 0x4 - core index']
  #allocation1 [shape = 'u32[144,128]{1,0:T(1,128)}', space=vmem, size = 0x12000, scoped, tag = 'internal scratch']
  %s0 = inlined_call_operand.hbm [shape: f32[2,128], index: 0, kind: input, shape index: {}]
  %s1 = inlined_call_operand.vmem [shape: f32[1,128], index: 1, kind: input, shape index: {}]
  %s2 = inlined_call_operand.hbm [shape: f32[2,128], index: 2, kind: output, shape index: {}]
  %s3 = sld [smem:[#allocation0]]
  $region22: #{tpu_custom_call.1} parent=0
    _
  %s5 = ssub.s32 1, %s3
  %s6 = scalar_select 0, %s5, %s3
  $region1: #{tpu_custom_call.1} parent=0
    #allocation2 [shape = 'u8[1024]{0}', space=vmem, size = 0x400, scoped, tag = 'input window, operand 0, single buffered']
    #allocation3 [shape = 's32[1]{0}', space=sflag, size = 0x4, scoped, tag = 'scoped memory for tpu_custom_call.1']
    #allocation4 [shape = 's32[1]{0}', space=sflag, size = 0x4, scoped, tag = 'scoped memory for tpu_custom_call.1']
    #allocation5 [shape = 'u8[1024]{0}', space=vmem, size = 0x400, scoped, tag = 'output window, operand 0, single buffered']
    %7 = vsyncpa [#allocation3], 0
    %8 = vsyncpa [#allocation4], 0
    // Predicated region
    $region2: #{tpu_custom_call.1} parent=1 // pred_check
      _
    $region3: #{tpu_custom_call.1} parent=1 // pred_check_branch
      %10 = sbr.rel (0) target = $region5
    $region4: #{tpu_custom_call.1} parent=1 // pred_region
      %s12 = ssub.s32 32, 32
      %13 = vsyncadd [#allocation3], %s12
      %s15 = sshll.u32 [#allocation2], 4
      %s16 = int_to_ptr.vmem [resolvable:$true] %s15
      %18 = dma.hbm_to_vmem [thread:$0]  %s0, 32, %s16, [#allocation3]
    $region5: #{tpu_custom_call.1} parent=1 // pred_fallthru
      _
    // Predicated region
    $region6: #{tpu_custom_call.1} parent=1 // pred_check
      _
    $region7: #{tpu_custom_call.1} parent=1 // pred_check_branch
      %20 = sbr.rel (0) target = $region9
    $region8: #{tpu_custom_call.1} parent=1 // pred_region
      _
    $region9: #{tpu_custom_call.1} parent=1 // pred_fallthru
      _
    // Predicated region
    $region10: #{tpu_custom_call.1} parent=1 // pred_check
      _
    $region11: #{tpu_custom_call.1} parent=1 // pred_check_branch
      %22 = sbr.rel (0) target = $region13
    $region12: #{tpu_custom_call.1} parent=1 // pred_region
      %23 = dma.done [#allocation3], 32
    $region13: #{tpu_custom_call.1} parent=1 // pred_fallthru
      _
    %v24 = vld [vmem:[#allocation2] sm:$0x3]
    %v25 = vld [vmem:[%s1] sm:$0x1]
    %v27 = vlaneseq
    %v28 = vshrl.u32 %v27, 7
    %v29 = vsub.s32 0, %v28
    %v30 = vrot.slane %v25, %v29
    %v32 = vadd.f32 %v24, %v30
    %33 = vst [vmem:[#allocation5] sm:$0x3] %v32
    // Predicated region
    $region14: #{tpu_custom_call.1} parent=1 // pred_check
      _
    $region15: #{tpu_custom_call.1} parent=1 // pred_check_branch
      %35 = sbr.rel (0) target = $region17
    $region16: #{tpu_custom_call.1} parent=1 // pred_region
      %s37 = ssub.s32 32, 32
      %38 = vsyncadd [#allocation4], %s37
      %s40 = sshll.u32 [#allocation5], 4
      %s41 = int_to_ptr.vmem [resolvable:$true] %s40
      %43 = dma.vmem_to_hbm [thread:$0]  %s41, 32, %s2, [#allocation4]
    $region17: #{tpu_custom_call.1} parent=1 // pred_fallthru
      _
    // Predicated region
    $region18: #{tpu_custom_call.1} parent=1 // pred_check
      _
    $region19: #{tpu_custom_call.1} parent=1 // pred_check_branch
      %45 = sbr.rel (0) target = $region21
    $region20: #{tpu_custom_call.1} parent=1 // pred_region
      %46 = dma.done [#allocation4], 32
    $region21: #{tpu_custom_call.1} parent=1 // pred_fallthru
      _
    %47 = vsyncpa [#allocation3], 1
    %48 = vsyncpa [#allocation4], 1

</llo_original>
